<compile_context>
chip_gen: v7x
topology: tpu7x:2x2x1
jax: 0.10.0
libtpu: 0.0.40
codegen_flags: <defaults>
</compile_context>

<pallas_src>
import functools

import jax
import jax.numpy as jnp
from jax.experimental import pallas as pl
from jax.experimental.pallas import tpu as pltpu

LANE = 128


def _gcn_agg_kernel(a_ref, y_ref, b_ref, o_ref, acc_ref, *, apply_exp):
    """One aggregation tile: acc += A[i,k] @ Y[k]; epilogue (acc + b, relu[, exp])."""
    k = pl.program_id(1)

    @pl.when(k == 0)
    def _init():
        acc_ref[...] = jnp.zeros_like(acc_ref)

    # bf16 operands, f32 accumulation on the MXU.
    acc_ref[...] += jnp.dot(a_ref[...], y_ref[...],
                            preferred_element_type=jnp.float32)

    @pl.when(k == pl.num_programs(1) - 1)
    def _finalize():
        h = acc_ref[...] + b_ref[...]
        h = jnp.maximum(h, 0.0)
        if apply_exp:
            h = jnp.exp(h)
        o_ref[...] = h.astype(o_ref.dtype)


def _gcn_aggregate(a_hat, y, b, *, apply_exp, out_dtype, tm, tk):
    """act(A_hat @ Y + b) with a tiled, pipelined pallas_call.

    a_hat: (n_pad, n_pad) bf16, y: (n_pad, f_out) bf16, b: (1, f_out) f32.
    """
    n = a_hat.shape[0]
    f_out = y.shape[1]
    grid = (n // tm, n // tk)

    kernel = functools.partial(_gcn_agg_kernel, apply_exp=apply_exp)
    return pl.pallas_call(
        kernel,
        out_shape=jax.ShapeDtypeStruct((n, f_out), out_dtype),
        grid_spec=pltpu.PrefetchScalarGridSpec(
            num_scalar_prefetch=0,
            grid=grid,
            in_specs=[
                pl.BlockSpec((tm, tk), lambda i, k: (i, k)),     # A_hat tile
                pl.BlockSpec((tk, f_out), lambda i, k: (k, 0)),  # Y tile
                pl.BlockSpec((1, f_out), lambda i, k: (0, 0)),   # bias (resident)
            ],
            out_specs=pl.BlockSpec((tm, f_out), lambda i, k: (i, 0)),
            scratch_shapes=[pltpu.VMEM((tm, f_out), jnp.float32)],
        ),
        compiler_params=pltpu.CompilerParams(
            dimension_semantics=("parallel", "arbitrary"),
        ),
    )(a_hat, y, b)


def _round_up(v, m):
    return (v + m - 1) // m * m


def _pad2(x, rows, cols):
    r, c = x.shape
    return jnp.pad(x, ((0, rows - r), (0, cols - c)))


def _choose_tiles(n, max_tile=512):
    """Pick (n_pad, tm, tk): big tiles, clamped to the padded problem.

    Guarantees tm | n_pad and tk | n_pad.  The row tile is halved when the
    problem would otherwise produce a single row block, so the 'parallel'
    row axis can shard across both TensorCores on v7x.
    """
    n128 = _round_up(n, LANE)
    tk = min(max_tile, n128)
    n_pad = _round_up(n128, tk)
    tm = tk
    if (n_pad // tm) < 2 and tm >= 2 * LANE and (tm // 2) % LANE == 0:
        tm = tm // 2
    return n_pad, tm, tk


def gcn_forward(a_hat, x, w1, b1, w2, b2, *, max_tile=512):
    """Two-layer GCN forward: exp(relu(A (relu(A (X W1) + b1)) W2 + b2))."""
    n, _ = x.shape
    hidden = w1.shape[1]
    out_dim = w2.shape[1]

    n_pad, tm, tk = _choose_tiles(n, max_tile)
    hid_pad = _round_up(hidden, LANE)
    out_pad = _round_up(out_dim, LANE)

    # Zero-padding is exact for this GCN (padded A rows/cols contribute
    # nothing, padded weight cols/rows are zero); pads are sliced off below.
    a_p = _pad2(a_hat, n_pad, n_pad).astype(jnp.bfloat16)
    x_p = _pad2(x, n_pad, x.shape[1]).astype(jnp.float32)
    w1_p = _pad2(w1, w1.shape[0], hid_pad).astype(jnp.float32)
    b1_p = _pad2(b1.reshape(1, -1), 1, hid_pad).astype(jnp.float32)
    w2_p = _pad2(w2, hid_pad, out_pad).astype(jnp.float32)
    b2_p = _pad2(b2.reshape(1, -1), 1, out_pad).astype(jnp.float32)

    # Layer 1: hoisted feature transform (tiny, XLA) then fused aggregation.
    y1 = jnp.dot(x_p, w1_p).astype(jnp.bfloat16)                 # (n_pad, hid_pad)
    h1 = _gcn_aggregate(a_p, y1, b1_p, apply_exp=False,
                        out_dtype=jnp.bfloat16, tm=tm, tk=tk)    # relu(A y1 + b1)

    # Dropout with p=drop_prob: identity for drop_prob=0 / eval mode.
    # TODO(synk): wire pltpu.prng_random_bits-based dropout if drop_prob > 0 in training.

    # Layer 2: hoisted transform + fused aggregation with relu -> exp epilogue.
    y2 = jnp.dot(h1.astype(jnp.float32), w2_p).astype(jnp.bfloat16)
    out = _gcn_aggregate(a_p, y2, b2_p, apply_exp=True,
                         out_dtype=jnp.float32, tm=tm, tk=tk)
    return out[:n, :out_dim]


def gcn_norm_dense(edge_index, edge_weight, num_nodes):
    """Dense symmetric-normalized adjacency a la PyG gcn_norm (add_self_loops=True).

    Self loops (weight 1) are only added for nodes that lack an explicit one,
    mirroring add_remaining_self_loops.
    """
    src = edge_index[0]
    dst = edge_index[1]
    a = jnp.zeros((num_nodes, num_nodes), jnp.float32)
    a = a.at[dst, src].add(edge_weight)                     # message src -> dst
    missing = (jnp.diag(a) == 0).astype(jnp.float32)        # add remaining self loops
    a = a + jnp.diag(missing)
    deg = a.sum(axis=1)                                     # weighted in-degree per target
    dinv = jnp.where(deg > 0, 1.0 / jnp.sqrt(deg), 0.0)
    return dinv[:, None] * a * dinv[None, :]


def glorot(key, shape):
    fan_in, fan_out = shape
    limit = jnp.sqrt(6.0 / (fan_in + fan_out))
    return jax.random.uniform(key, shape, jnp.float32, -limit, limit)


if __name__ == "__main__":
    # Small synthetic graph: 200 nodes (padded to 256 inside), in=16, hidden=32, out=8.
    N, IN_DIM, HIDDEN, OUT_DIM = 200, 16, 32, 8
    N_EDGES = 600
    key = jax.random.PRNGKey(0)
    k_x, k_e, k_w, k_w1, k_w2, k_b1, k_b2 = jax.random.split(key, 7)

    x = jax.random.normal(k_x, (N, IN_DIM), jnp.float32)
    edge_index = jax.random.randint(k_e, (2, N_EDGES), 0, N)
    edge_weight = jax.random.uniform(k_w, (N_EDGES,), jnp.float32, 0.5, 1.5)

    # Glorot weights as in PyG GCNConv; biases randomized to exercise the bias path.
    w1 = glorot(k_w1, (IN_DIM, HIDDEN))
    b1 = 0.1 * jax.random.normal(k_b1, (HIDDEN,), jnp.float32)
    w2 = glorot(k_w2, (HIDDEN, OUT_DIM))
    b2 = 0.1 * jax.random.normal(k_b2, (OUT_DIM,), jnp.float32)

    a_hat = gcn_norm_dense(edge_index, edge_weight, N)

    out = gcn_forward(a_hat, x, w1, b1, w2, b2)
    out = jax.block_until_ready(out)

    # Pure-JAX reference mirroring the kernel's precision path
    # (bf16 storage of A / Y / H1, f32 accumulation, same association order).
    af = a_hat.astype(jnp.bfloat16).astype(jnp.float32)
    y1_ref = (x @ w1).astype(jnp.bfloat16).astype(jnp.float32)
    h1_ref = jnp.maximum(af @ y1_ref + b1[None, :], 0.0)
    h1_ref = h1_ref.astype(jnp.bfloat16).astype(jnp.float32)
    y2_ref = (h1_ref @ w2).astype(jnp.bfloat16).astype(jnp.float32)
    ref = jnp.exp(jnp.maximum(af @ y2_ref + b2[None, :], 0.0))

    assert out.shape == (N, OUT_DIM)
    max_err = float(jnp.max(jnp.abs(out - ref)))
    assert jnp.allclose(out, ref, atol=2e-2, rtol=2e-2), f"max abs err {max_err}"

    print("KERNEL_OK")
</pallas_src>

<mosaic_0001>
module attributes {stable_mosaic.version = 11 : i64} {
  func.func @_gcn_agg_kernel(%arg0: i32, %arg1: i32, %arg2: memref<128x256xbf16, #tpu.memory_space<vmem>>, %arg3: memref<256x128xbf16, #tpu.memory_space<vmem>>, %arg4: memref<1x128xf32, #tpu.memory_space<vmem>>, %arg5: memref<128x128xbf16, #tpu.memory_space<vmem>>, %arg6: memref<128x128xf32, #tpu.memory_space<vmem>>) attributes {dimension_semantics = [#tpu.dimension_semantics<parallel>, #tpu.dimension_semantics<arbitrary>], iteration_bounds = array<i64: 2, 1>, scalar_prefetch = 0 : i64, scratch_operands = 1 : i64, tpu.core_type = #tpu.core_type<tc>, window_params = [{transform_indices = @transform_0, window_bounds = array<i64: 128, 256>}, {transform_indices = @transform_1, window_bounds = array<i64: 256, 128>}, {pipeline_mode = #tpu.pipeline_mode<synchronous>, transform_indices = @transform_2, window_bounds = array<i64: 1, 128>}, {transform_indices = @transform_3, window_bounds = array<i64: 128, 128>}]} {
    %c0_i32 = arith.constant 0 : i32
    %0 = arith.cmpi eq, %arg1, %c0_i32 : i32
    %1 = arith.extui %0 : i1 to i32
    %c0_i32_0 = arith.constant 0 : i32
    %2 = arith.cmpi ne, %1, %c0_i32_0 : i32
    scf.if %2 {
      %cst_10 = arith.constant 0.000000e+00 : f32
      %12 = vector.broadcast %cst_10 : f32 to vector<128x128xf32>
      %c0_11 = arith.constant 0 : index
      %c0_12 = arith.constant 0 : index
      %13 = vector.load %arg6[%c0_11, %c0_12] : memref<128x128xf32, #tpu.memory_space<vmem>>, vector<128x128xf32>
      tpu.vector_store %arg6[%c0_11, %c0_12], %12 {strides = array<i32>} : memref<128x128xf32, #tpu.memory_space<vmem>>, vector<128x128xf32>,
    } else {
    }
    %c0 = arith.constant 0 : index
    %c0_1 = arith.constant 0 : index
    %3 = vector.load %arg6[%c0, %c0_1] : memref<128x128xf32, #tpu.memory_space<vmem>>, vector<128x128xf32>
    %c0_2 = arith.constant 0 : index
    %c0_3 = arith.constant 0 : index
    %4 = vector.load %arg2[%c0_2, %c0_3] : memref<128x256xbf16, #tpu.memory_space<vmem>>, vector<128x256xbf16>
    %c0_4 = arith.constant 0 : index
    %c0_5 = arith.constant 0 : index
    %5 = vector.load %arg3[%c0_4, %c0_5] : memref<256x128xbf16, #tpu.memory_space<vmem>>, vector<256x128xbf16>
    %cst = arith.constant dense<0.000000e+00> : vector<128x128xf32>
    %6 = tpu.matmul %4, %5, %cst {dimension_numbers = #tpu.dot_dimension_numbers<[1], [0], [0], [1], [0, 0, 1, 1], [], []>} : vector<128x256xbf16>, vector<256x128xbf16>, vector<128x128xf32> -> vector<128x128xf32>
    %7 = arith.addf %3, %6 : vector<128x128xf32>
    %c0_6 = arith.constant 0 : index
    %c0_7 = arith.constant 0 : index
    %8 = vector.load %arg6[%c0_6, %c0_7] : memref<128x128xf32, #tpu.memory_space<vmem>>, vector<128x128xf32>
    tpu.vector_store %arg6[%c0_6, %c0_7], %7 {strides = array<i32>} : memref<128x128xf32, #tpu.memory_space<vmem>>, vector<128x128xf32>,
    %c0_i32_8 = arith.constant 0 : i32
    %9 = arith.cmpi eq, %arg1, %c0_i32_8 : i32
    %10 = arith.extui %9 : i1 to i32
    %c0_i32_9 = arith.constant 0 : i32
    %11 = arith.cmpi ne, %10, %c0_i32_9 : i32
    scf.if %11 {
      %c0_10 = arith.constant 0 : index
      %c0_11 = arith.constant 0 : index
      %12 = vector.load %arg6[%c0_10, %c0_11] : memref<128x128xf32, #tpu.memory_space<vmem>>, vector<128x128xf32>
      %c0_12 = arith.constant 0 : index
      %c0_13 = arith.constant 0 : index
      %13 = vector.load %arg4[%c0_12, %c0_13] : memref<1x128xf32, #tpu.memory_space<vmem>>, vector<1x128xf32>
      %14 = vector.broadcast %13 : vector<1x128xf32> to vector<128x128xf32>
      %15 = arith.addf %12, %14 : vector<128x128xf32>
      %cst_14 = arith.constant 0.000000e+00 : f32
      %16 = vector.broadcast %cst_14 : f32 to vector<128x128xf32>
      %17 = arith.maximumf %15, %16 : vector<128x128xf32>
      %18 = arith.truncf %17 : vector<128x128xf32> to vector<128x128xbf16>
      %c0_15 = arith.constant 0 : index
      %c0_16 = arith.constant 0 : index
      %19 = vector.load %arg5[%c0_15, %c0_16] : memref<128x128xbf16, #tpu.memory_space<vmem>>, vector<128x128xbf16>
      tpu.vector_store %arg5[%c0_15, %c0_16], %18 {strides = array<i32>} : memref<128x128xbf16, #tpu.memory_space<vmem>>, vector<128x128xbf16>,
    } else {
    }
    return
  }
  func.func @transform_0(%arg0: i32, %arg1: i32) -> (i32, i32) {
    %c0_i32 = arith.constant 0 : i32
    return %arg0, %arg1 : i32, i32
  }
  func.func @transform_1(%arg0: i32, %arg1: i32) -> (i32, i32) {
    %c0_i32 = arith.constant 0 : i32
    %c0_i32_0 = arith.constant 0 : i32
    return %arg1, %c0_i32 : i32, i32
  }
  func.func @transform_2(%arg0: i32, %arg1: i32) -> (i32, i32) {
    %c0_i32 = arith.constant 0 : i32
    %c0_i32_0 = arith.constant 0 : i32
    %c0_i32_1 = arith.constant 0 : i32
    return %c0_i32, %c0_i32_0 : i32, i32
  }
  func.func @transform_3(%arg0: i32, %arg1: i32) -> (i32, i32) {
    %c0_i32 = arith.constant 0 : i32
    %c0_i32_0 = arith.constant 0 : i32
    return %arg0, %c0_i32 : i32, i32
  }
}

</mosaic_0001>

<llo_original>
// kernel: tpu_custom_call.1
$region0: #{tpu_custom_call.1}
  #allocation0 [shape = 'u32[]', space=smem, size = 0x4, offset = 0x4, fixed_abs, tag = 'smem constant byte address 0x4 - core index']
  #allocation1 [shape = 'u32[144,128]{1,0:T(1,128)}', space=vmem, size = 0x12000, scoped, tag = 'internal scratch']
  #allocation2 [shape = 'f32[128,128]{1,0:T(8,128)}', space=vmem, size = 0x10000, scoped, tag = 'scratch operand']
  %s0 = inlined_call_operand.hbm [shape: bf16[256,256], index: 0, kind: input, shape index: {}]
  %s1 = inlined_call_operand.hbm [shape: bf16[256,128], index: 1, kind: input, shape index: {}]
  %s2 = inlined_call_operand.vmem [shape: f32[1,128], index: 2, kind: input, shape index: {}]
  %s3 = inlined_call_operand.hbm [shape: bf16[256,128], index: 3, kind: output, shape index: {}]
  %s4 = sld [smem:[#allocation0]]
  $region61: #{tpu_custom_call.1} parent=0
    _
  %s6 = ssub.s32 1, %s4
  %s7 = scalar_select 0, %s6, %s4
  $region1: #{tpu_custom_call.1} parent=0
    #allocation3 [shape = 'u8[131072]{0}', space=vmem, size = 0x20000, scoped, tag = 'input window, operand 0']
    #allocation4 [shape = 's32[2]{0}', space=sflag, size = 0x8, scoped, tag = 'scoped memory for tpu_custom_call.1']
    #allocation5 [shape = 's32[2]{0}', space=sflag, size = 0x8, scoped, tag = 'scoped memory for tpu_custom_call.1']
    #allocation6 [shape = 'u8[65536]{0}', space=vmem, size = 0x10000, scoped, tag = 'input window, operand 1, single buffered']
    #allocation7 [shape = 's32[1]{0}', space=sflag, size = 0x4, scoped, tag = 'scoped memory for tpu_custom_call.1']
    #allocation8 [shape = 'u8[65536]{0}', space=vmem, size = 0x10000, scoped, tag = 'output window, operand 0']
    %8 = vsyncpa [#allocation4], 0
    %s9 = scalar_lea.sflag [#allocation4], 1
    %10 = vsyncpa %s9, 0
    %11 = vsyncpa [#allocation7], 0
    %12 = vsyncpa [#allocation5], 0
    %s13 = scalar_lea.sflag [#allocation5], 1
    %14 = vsyncpa %s13, 0
    loop: start=0, step=1, limit=4
    $region2: #{tpu_custom_call.1} parent=1 // loop_pre_header
      _
    $region3: #{tpu_custom_call.1} parent=1 // loop_header
      %s16 = sphi 0, %s20
      %p17 = scmp.ge.s32.totalorder %s16, 4
      %s23 = sphi 0, %s35
      %s24 = sphi 0, %s31
      %s25 = sphi 0, %s23
      %s26 = sphi 0, %s24
      %s27 = sphi 0, %s25
      %s28 = sphi 0, %s26
      %s40 = sphi 0, %s42
      %s43 = sphi 0, %s40
      %s44 = sphi 0, %s43
      %s60 = sphi 0, %s44
      %s66 = sphi 0, %s68
      %s69 = sphi 0, %s66
      %s70 = sphi 0, %s69
      %s86 = sphi 0, %s70
      %s90 = sphi 0, %s90
      %s92 = sphi 0, %s90
      %s93 = sphi 0, %s92
      %s107 = sphi 0, %s93
      %s113 = sphi 0, %s115
      %s116 = sphi 0, %s113
      %s117 = sphi 0, %s116
      %s133 = sphi 0, %s117
    $region4: #{tpu_custom_call.1} parent=1 // loop_header_branch
      %19 = sbr.rel (%p17) target = $region8
    $region5: #{tpu_custom_call.1} parent=1 // loop_body
      %s21 = ssub.s32 %s16, 1
      %s22 = ssub.s32 %s16, 2
      %s29 = sadd.s32 1, %s24
      %p30 = scmp.ge.s32.totalorder %s29, 1
      %s31 = scalar_select %p30, 0, %s29
      %s32 = sadd.s32 1, %s23
      %s33 = scalar_select %p30, %s32, %s23
      %p34 = scmp.ge.s32.totalorder %s33, 2
      %s35 = scalar_select %p34, 0, %s33
      %s36 = ssub.s32 %s23, %s35
      %s37 = ssub.s32 %s24, %s31
      %s38 = sor.u32 %s36, %s37
      %p39 = scmp.eq.s32.totalorder %s38, 0
      %s41 = sadd.s32 %s40, 1
      %s42 = scalar_select %p39, %s40, %s41
      %p45 = pneg %p39
      %p46 = scmp.eq.s32.totalorder %s16, 1
      %p47 = por %p45, %p46
      %p48 = scmp.ne.s32.totalorder %s40, %s43
      %p49 = scmp.eq.s32.totalorder %s16, 0
      %p50 = por %p48, %p49
      %p51 = scmp.ne.s32.totalorder %s40, %s43
      %p52 = scmp.eq.s32.totalorder %s21, 1
      %p53 = por %p51, %p52
      %p54 = scmp.ne.s32.totalorder %s43, %s44
      %p55 = scmp.eq.s32.totalorder %s21, 0
      %p56 = por %p54, %p55
      %p57 = scmp.ne.s32.totalorder %s43, %s44
      %p58 = scmp.eq.s32.totalorder %s22, 1
      %p59 = por %p57, %p58
      %p61 = scmp.ne.s32.totalorder %s44, %s60
      %p62 = scmp.eq.s32.totalorder %s22, 0
      %p63 = por %p61, %p62
      %s64 = ssub.s32 %s24, %s31
      %p65 = scmp.eq.s32.totalorder %s64, 0
      %s67 = sadd.s32 %s66, 1
      %s68 = scalar_select %p65, %s66, %s67
      %p71 = pneg %p65
      %p72 = scmp.eq.s32.totalorder %s16, 1
      %p73 = por %p71, %p72
      %p74 = scmp.ne.s32.totalorder %s66, %s69
      %p75 = scmp.eq.s32.totalorder %s16, 0
      %p76 = por %p74, %p75
      %p77 = scmp.ne.s32.totalorder %s66, %s69
      %p78 = scmp.eq.s32.totalorder %s21, 1
      %p79 = por %p77, %p78
      %p80 = scmp.ne.s32.totalorder %s69, %s70
      %p81 = scmp.eq.s32.totalorder %s21, 0
      %p82 = por %p80, %p81
      %p83 = scmp.ne.s32.totalorder %s69, %s70
      %p84 = scmp.eq.s32.totalorder %s22, 1
      %p85 = por %p83, %p84
      %p87 = scmp.ne.s32.totalorder %s70, %s86
      %p88 = scmp.eq.s32.totalorder %s22, 0
      %p89 = por %p87, %p88
      %s91 = sadd.s32 %s90, 1
      %p94 = scmp.eq.s32.totalorder %s16, 1
      %p95 = scmp.ne.s32.totalorder %s90, %s92
      %p96 = scmp.eq.s32.totalorder %s16, 0
      %p97 = por %p95, %p96
      %p98 = scmp.ne.s32.totalorder %s90, %s92
      %p99 = scmp.eq.s32.totalorder %s21, 1
      %p100 = por %p98, %p99
      %p101 = scmp.ne.s32.totalorder %s92, %s93
      %p102 = scmp.eq.s32.totalorder %s21, 0
      %p103 = por %p101, %p102
      %p104 = scmp.ne.s32.totalorder %s92, %s93
      %p105 = scmp.eq.s32.totalorder %s22, 1
      %p106 = por %p104, %p105
      %p108 = scmp.ne.s32.totalorder %s93, %s107
      %p109 = scmp.eq.s32.totalorder %s22, 0
      %p110 = por %p108, %p109
      %s111 = ssub.s32 %s23, %s35
      %p112 = scmp.eq.s32.totalorder %s111, 0
      %s114 = sadd.s32 %s113, 1
      %s115 = scalar_select %p112, %s113, %s114
      %p118 = pneg %p112
      %p119 = scmp.eq.s32.totalorder %s16, 1
      %p120 = por %p118, %p119
      %p121 = scmp.ne.s32.totalorder %s113, %s116
      %p122 = scmp.eq.s32.totalorder %s16, 0
      %p123 = por %p121, %p122
      %p124 = scmp.ne.s32.totalorder %s113, %s116
      %p125 = scmp.eq.s32.totalorder %s21, 1
      %p126 = por %p124, %p125
      %p127 = scmp.ne.s32.totalorder %s116, %s117
      %p128 = scmp.eq.s32.totalorder %s21, 0
      %p129 = por %p127, %p128
      %p130 = scmp.ne.s32.totalorder %s116, %s117
      %p131 = scmp.eq.s32.totalorder %s22, 1
      %p132 = por %p130, %p131
      %p134 = scmp.ne.s32.totalorder %s117, %s133
      %p135 = scmp.eq.s32.totalorder %s22, 0
      %p136 = por %p134, %p135
      %p137 = scmp.le.s32.totalorder 1, %s16
      %p138 = scmp.lt.s32.totalorder %s16, 3
      %p139 = pnand %p137, %p138
      %p140 = pneg %p139
      // Predicated region
      $region9: #{tpu_custom_call.1} parent=5 // pred_check
        _
      $region10: #{tpu_custom_call.1} parent=5 // pred_check_branch
        %142 = sbr.rel (%p139) target = $region12
      $region11: #{tpu_custom_call.1} parent=5 // pred_region
        %s143 = ssub.s32 %s16, 1
        // Predicated region
        $region13: #{tpu_custom_call.1} parent=11 // pred_check
          %p144 = pneg %p82
        $region14: #{tpu_custom_call.1} parent=11 // pred_check_branch
          %146 = sbr.rel (%p144) target = $region16
        $region15: #{tpu_custom_call.1} parent=11 // pred_region
          %s147 = smul.u32 32, %s26
          %s149 = ssub.s32 2048, 2048
          %150 = vsyncadd [#allocation7], %s149
          %s151 = smul.addr %s147, 64
          %s152 = scalar_lea.hbm %s1, %s151
          %s153 = sshll.u32 [#allocation6], 4
          %s154 = int_to_ptr.vmem [resolvable:$true] %s153
          %159 = dma.hbm_to_vmem [thread:$0]  %s152, 2048, %s154, [#allocation7], 64, 64, 4
        $region16: #{tpu_custom_call.1} parent=11 // pred_fallthru
          _
        // Predicated region
        $region17: #{tpu_custom_call.1} parent=11 // pred_check
          %p160 = pneg %p103
        $region18: #{tpu_custom_call.1} parent=11 // pred_check_branch
          %162 = sbr.rel (%p160) target = $region20
        $region19: #{tpu_custom_call.1} parent=11 // pred_region
          _
        $region20: #{tpu_custom_call.1} parent=11 // pred_fallthru
          _
      $region12: #{tpu_custom_call.1} parent=5 // pred_fallthru
        _
      %p163 = scmp.lt.s32.totalorder %s16, 2
      // Predicated region
      $region21: #{tpu_custom_call.1} parent=5 // pred_check
        %p164 = pneg %p163
      $region22: #{tpu_custom_call.1} parent=5 // pred_check_branch
        %166 = sbr.rel (%p164) target = $region24
      $region23: #{tpu_custom_call.1} parent=5 // pred_region
        // Predicated region
        $region25: #{tpu_custom_call.1} parent=23 // pred_check
          %p167 = pneg %p50
        $region26: #{tpu_custom_call.1} parent=23 // pred_check_branch
          %169 = sbr.rel (%p167) target = $region28
        $region27: #{tpu_custom_call.1} parent=23 // pred_region
          %s170 = sand.u32 %s40, 1
          %s171 = scalar_lea.sflag [#allocation4], %s170
          %s172 = sand.u32 %s40, 1
          %s173 = smul.addr %s172, 128
          %s174 = scalar_lea.vmem [#allocation3], %s173
          %s175 = smul.u32 16, %s23
          %s176 = smul.u32 2, %s24
          %s178 = ssub.s32 2048, 2048
          %179 = vsyncadd %s171, %s178
          %s180 = smul.addr %s175, 2
          %s181 = sadd.s32 %s176, %s180
          %s182 = smul.addr %s181, 64
          %s183 = scalar_lea.hbm %s0, %s182
          %s184 = sshll.u32 %s174, 4
          %s185 = int_to_ptr.vmem [resolvable:$true] %s184
          %190 = dma.hbm_to_vmem [thread:$0]  %s183, 2048, %s185, %s171, 128, 128, 8
        $region28: #{tpu_custom_call.1} parent=23 // pred_fallthru
          _
      $region24: #{tpu_custom_call.1} parent=5 // pred_fallthru
        _
      %p191 = scmp.le.s32.totalorder 1, %s16
      %p192 = scmp.lt.s32.totalorder %s16, 3
      %p193 = pnand %p191, %p192
      %p194 = pneg %p193
      // Predicated region
      $region29: #{tpu_custom_call.1} parent=5 // pred_check
        _
      $region30: #{tpu_custom_call.1} parent=5 // pred_check_branch
        %196 = sbr.rel (%p193) target = $region32
      $region31: #{tpu_custom_call.1} parent=5 // pred_region
        %s197 = ssub.s32 %s16, 1
        %s198 = sand.u32 %s43, 1
        %s199 = scalar_lea.sflag [#allocation4], %s198
        %s200 = sand.u32 %s43, 1
        %s201 = smul.addr %s200, 128
        %s202 = scalar_lea.vmem [#allocation3], %s201
        // Predicated region
        $region33: #{tpu_custom_call.1} parent=31 // pred_check
          %p203 = pneg %p56
        $region34: #{tpu_custom_call.1} parent=31 // pred_check_branch
          %205 = sbr.rel (%p203) target = $region36
        $region35: #{tpu_custom_call.1} parent=31 // pred_region
          %206 = dma.done %s199, 2048
        $region36: #{tpu_custom_call.1} parent=31 // pred_fallthru
          _
        // Predicated region
        $region37: #{tpu_custom_call.1} parent=31 // pred_check
          %p207 = pneg %p82
        $region38: #{tpu_custom_call.1} parent=31 // pred_check_branch
          %209 = sbr.rel (%p207) target = $region40
        $region39: #{tpu_custom_call.1} parent=31 // pred_region
          %210 = dma.done [#allocation7], 2048
        $region40: #{tpu_custom_call.1} parent=31 // pred_fallthru
          _
        %s211 = sand.u32 %s43, 1
        %s212 = scalar_lea.sflag [#allocation4], %s211
        %s213 = sand.u32 %s43, 1
        %s214 = smul.addr %s213, 128
        %s215 = scalar_lea.vmem [#allocation3], %s214
        %p216 = pneg %p56
        %p217 = pneg %p53
        %p218 = pneg %p82
        %p219 = pneg %p79
        %p220 = pneg %p103
        %p221 = pneg %p100
        %p222 = pneg %p129
        %p223 = pneg %p126
        %s224 = sand.u32 %s116, 1
        %s225 = scalar_lea.sflag [#allocation5], %s224
        %s226 = sand.u32 %s116, 1
        %s227 = smul.addr %s226, 64
        %s228 = scalar_lea.vmem [#allocation8], %s227
        %s229 = smul.u32 16, %s25
        %s230 = smul.u32 2, %s26
        %s231 = smul.u32 32, %s26
        %s232 = smul.u32 16, %s25
        %p234 = scmp.eq.s32.totalorder %s26, 0
        // Predicated region
        $region41: #{tpu_custom_call.1} parent=31 // pred_check
          %p235 = pneg %p234
        $region42: #{tpu_custom_call.1} parent=31 // pred_check_branch
          %237 = sbr.rel (%p235) target = $region44
        $region43: #{tpu_custom_call.1} parent=31 // pred_region
          %238 = vst [vmem:[#allocation2] sm:$0xff] 0.0
          %239 = vst [vmem:[#allocation2 + $0x8] sm:$0xff] 0.0
          %240 = vst [vmem:[#allocation2 + $0x10] sm:$0xff] 0.0
          %241 = vst [vmem:[#allocation2 + $0x18] sm:$0xff] 0.0
          %242 = vst [vmem:[#allocation2 + $0x20] sm:$0xff] 0.0
          %243 = vst [vmem:[#allocation2 + $0x28] sm:$0xff] 0.0
          %244 = vst [vmem:[#allocation2 + $0x30] sm:$0xff] 0.0
          %245 = vst [vmem:[#allocation2 + $0x38] sm:$0xff] 0.0
          %246 = vst [vmem:[#allocation2 + $0x40] sm:$0xff] 0.0
          %247 = vst [vmem:[#allocation2 + $0x48] sm:$0xff] 0.0
          %248 = vst [vmem:[#allocation2 + $0x50] sm:$0xff] 0.0
          %249 = vst [vmem:[#allocation2 + $0x58] sm:$0xff] 0.0
          %250 = vst [vmem:[#allocation2 + $0x60] sm:$0xff] 0.0
          %251 = vst [vmem:[#allocation2 + $0x68] sm:$0xff] 0.0
          %252 = vst [vmem:[#allocation2 + $0x70] sm:$0xff] 0.0
          %253 = vst [vmem:[#allocation2 + $0x78] sm:$0xff] 0.0
        $region44: #{tpu_custom_call.1} parent=31 // pred_fallthru
          _
        %v254 = vld [vmem:[#allocation2] sm:$0xff]
        %v255 = vld [vmem:[#allocation2 + $0x8] sm:$0xff]
        %v256 = vld [vmem:[#allocation2 + $0x10] sm:$0xff]
        %v257 = vld [vmem:[#allocation2 + $0x18] sm:$0xff]
        %v258 = vld [vmem:[#allocation2 + $0x20] sm:$0xff]
        %v259 = vld [vmem:[#allocation2 + $0x28] sm:$0xff]
        %v260 = vld [vmem:[#allocation2 + $0x30] sm:$0xff]
        %v261 = vld [vmem:[#allocation2 + $0x38] sm:$0xff]
        %v262 = vld [vmem:[#allocation2 + $0x40] sm:$0xff]
        %v263 = vld [vmem:[#allocation2 + $0x48] sm:$0xff]
        %v264 = vld [vmem:[#allocation2 + $0x50] sm:$0xff]
        %v265 = vld [vmem:[#allocation2 + $0x58] sm:$0xff]
        %v266 = vld [vmem:[#allocation2 + $0x60] sm:$0xff]
        %v267 = vld [vmem:[#allocation2 + $0x68] sm:$0xff]
        %v268 = vld [vmem:[#allocation2 + $0x70] sm:$0xff]
        %v269 = vld [vmem:[#allocation2 + $0x78] sm:$0xff]
        %v270 = vld [vmem:[%s202] sm:$0xff]
        %v271 = vld [vmem:[%s202 + $0x8] sm:$0xff]
        %v272 = vld [vmem:[%s202 + $0x10] sm:$0xff]
        %v273 = vld [vmem:[%s202 + $0x18] sm:$0xff]
        %v274 = vld [vmem:[%s202 + $0x20] sm:$0xff]
        %v275 = vld [vmem:[%s202 + $0x28] sm:$0xff]
        %v276 = vld [vmem:[%s202 + $0x30] sm:$0xff]
        %v277 = vld [vmem:[%s202 + $0x38] sm:$0xff]
        %v278 = vld [vmem:[%s202 + $0x40] sm:$0xff]
        %v279 = vld [vmem:[%s202 + $0x48] sm:$0xff]
        %v280 = vld [vmem:[%s202 + $0x50] sm:$0xff]
        %v281 = vld [vmem:[%s202 + $0x58] sm:$0xff]
        %v282 = vld [vmem:[%s202 + $0x60] sm:$0xff]
        %v283 = vld [vmem:[%s202 + $0x68] sm:$0xff]
        %v284 = vld [vmem:[%s202 + $0x70] sm:$0xff]
        %v285 = vld [vmem:[%s202 + $0x78] sm:$0xff]
        %v286 = vld [vmem:[#allocation6] sm:$0xf]
        %v287 = vld [vmem:[#allocation6 + $0x4] sm:$0xf]
        %v288 = vld [vmem:[#allocation6 + $0x8] sm:$0xf]
        %v289 = vld [vmem:[#allocation6 + $0xc] sm:$0xf]
        %v290 = vld [vmem:[#allocation6 + $0x10] sm:$0xf]
        %v291 = vld [vmem:[#allocation6 + $0x14] sm:$0xf]
        %v292 = vld [vmem:[#allocation6 + $0x18] sm:$0xf]
        %v293 = vld [vmem:[#allocation6 + $0x1c] sm:$0xf]
        %v294 = vld [vmem:[#allocation6 + $0x20] sm:$0xf]
        %v295 = vld [vmem:[#allocation6 + $0x24] sm:$0xf]
        %v296 = vld [vmem:[#allocation6 + $0x28] sm:$0xf]
        %v297 = vld [vmem:[#allocation6 + $0x2c] sm:$0xf]
        %v298 = vld [vmem:[#allocation6 + $0x30] sm:$0xf]
        %v299 = vld [vmem:[#allocation6 + $0x34] sm:$0xf]
        %v300 = vld [vmem:[#allocation6 + $0x38] sm:$0xf]
        %v301 = vld [vmem:[#allocation6 + $0x3c] sm:$0xf]
        %v302 = vld [vmem:[#allocation6 + $0x40] sm:$0xf]
        %v303 = vld [vmem:[#allocation6 + $0x44] sm:$0xf]
        %v304 = vld [vmem:[#allocation6 + $0x48] sm:$0xf]
        %v305 = vld [vmem:[#allocation6 + $0x4c] sm:$0xf]
        %v306 = vld [vmem:[#allocation6 + $0x50] sm:$0xf]
        %v307 = vld [vmem:[#allocation6 + $0x54] sm:$0xf]
        %v308 = vld [vmem:[#allocation6 + $0x58] sm:$0xf]
        %v309 = vld [vmem:[#allocation6 + $0x5c] sm:$0xf]
        %v310 = vld [vmem:[#allocation6 + $0x60] sm:$0xf]
        %v311 = vld [vmem:[#allocation6 + $0x64] sm:$0xf]
        %v312 = vld [vmem:[#allocation6 + $0x68] sm:$0xf]
        %v313 = vld [vmem:[#allocation6 + $0x6c] sm:$0xf]
        %v314 = vld [vmem:[#allocation6 + $0x70] sm:$0xf]
        %v315 = vld [vmem:[#allocation6 + $0x74] sm:$0xf]
        %v316 = vld [vmem:[#allocation6 + $0x78] sm:$0xf]
        %v317 = vld [vmem:[#allocation6 + $0x7c] sm:$0xf]
        %v334 = vunpack.c.l.b16 %v270
        %v335 = vunpack.c.h.b16 %v270
        %v336 = vunpack.c.l.b16 %v271
        %v337 = vunpack.c.h.b16 %v271
        %v338 = vunpack.c.l.b16 %v272
        %v339 = vunpack.c.h.b16 %v272
        %v340 = vunpack.c.l.b16 %v273
        %v341 = vunpack.c.h.b16 %v273
        %v342 = vunpack.c.l.b16 %v274
        %v343 = vunpack.c.h.b16 %v274
        %v344 = vunpack.c.l.b16 %v275
        %v345 = vunpack.c.h.b16 %v275
        %v346 = vunpack.c.l.b16 %v276
        %v347 = vunpack.c.h.b16 %v276
        %v348 = vunpack.c.l.b16 %v277
        %v349 = vunpack.c.h.b16 %v277
        %v350 = vunpack.c.l.b16 %v278
        %v351 = vunpack.c.h.b16 %v278
        %v352 = vunpack.c.l.b16 %v279
        %v353 = vunpack.c.h.b16 %v279
        %v354 = vunpack.c.l.b16 %v280
        %v355 = vunpack.c.h.b16 %v280
        %v356 = vunpack.c.l.b16 %v281
        %v357 = vunpack.c.h.b16 %v281
        %v358 = vunpack.c.l.b16 %v282
        %v359 = vunpack.c.h.b16 %v282
        %v360 = vunpack.c.l.b16 %v283
        %v361 = vunpack.c.h.b16 %v283
        %v362 = vunpack.c.l.b16 %v284
        %v363 = vunpack.c.h.b16 %v284
        %v364 = vunpack.c.l.b16 %v285
        %v365 = vunpack.c.h.b16 %v285
        %v366 = vpack.c.b16 %v336, %v334
        %v367 = vpack.c.b16 %v337, %v335
        %v368 = vpack.c.b16 %v340, %v338
        %v369 = vpack.c.b16 %v341, %v339
        %v370 = vpack.c.b16 %v344, %v342
        %v371 = vpack.c.b16 %v345, %v343
        %v372 = vpack.c.b16 %v348, %v346
        %v373 = vpack.c.b16 %v349, %v347
        %v374 = vpack.c.b16 %v352, %v350
        %v375 = vpack.c.b16 %v353, %v351
        %v376 = vpack.c.b16 %v356, %v354
        %v377 = vpack.c.b16 %v357, %v355
        %v378 = vpack.c.b16 %v360, %v358
        %v379 = vpack.c.b16 %v361, %v359
        %v380 = vpack.c.b16 %v364, %v362
        %v381 = vpack.c.b16 %v365, %v363
        %v430 = vunpack.c.l.b16 %v286
        %v431 = vunpack.c.l.b16 %v287
        %v432 = vunpack.c.l.b16 %v288
        %v433 = vunpack.c.l.b16 %v289
        %v434 = vunpack.c.l.b16 %v290
        %v435 = vunpack.c.l.b16 %v291
        %v436 = vunpack.c.l.b16 %v292
        %v437 = vunpack.c.l.b16 %v293
        %v438 = vunpack.c.l.b16 %v294
        %v439 = vunpack.c.l.b16 %v295
        %v440 = vunpack.c.l.b16 %v296
        %v441 = vunpack.c.l.b16 %v297
        %v442 = vunpack.c.l.b16 %v298
        %v443 = vunpack.c.l.b16 %v299
        %v444 = vunpack.c.l.b16 %v300
        %v445 = vunpack.c.l.b16 %v301
        %v446 = vunpack.c.l.b16 %v302
        %v447 = vunpack.c.l.b16 %v303
        %v448 = vunpack.c.l.b16 %v304
        %v449 = vunpack.c.l.b16 %v305
        %v450 = vunpack.c.l.b16 %v306
        %v451 = vunpack.c.l.b16 %v307
        %v452 = vunpack.c.l.b16 %v308
        %v453 = vunpack.c.l.b16 %v309
        %v454 = vunpack.c.l.b16 %v310
        %v455 = vunpack.c.l.b16 %v311
        %v456 = vunpack.c.l.b16 %v312
        %v457 = vunpack.c.l.b16 %v313
        %v458 = vunpack.c.l.b16 %v314
        %v459 = vunpack.c.l.b16 %v315
        %v460 = vunpack.c.l.b16 %v316
        %v461 = vunpack.c.l.b16 %v317
        %v462 = vpack.c.b16 %v431, %v430
        %v463 = vpack.c.b16 %v433, %v432
        %v464 = vpack.c.b16 %v435, %v434
        %v465 = vpack.c.b16 %v437, %v436
        %v466 = vpack.c.b16 %v439, %v438
        %v467 = vpack.c.b16 %v441, %v440
        %v468 = vpack.c.b16 %v443, %v442
        %v469 = vpack.c.b16 %v445, %v444
        %v470 = vpack.c.b16 %v447, %v446
        %v471 = vpack.c.b16 %v449, %v448
        %v472 = vpack.c.b16 %v451, %v450
        %v473 = vpack.c.b16 %v453, %v452
        %v474 = vpack.c.b16 %v455, %v454
        %v475 = vpack.c.b16 %v457, %v456
        %v476 = vpack.c.b16 %v459, %v458
        %v477 = vpack.c.b16 %v461, %v460
        %494 = vmatprep.subr.bf16.mxu0 0
        %495 = vmatpush1.bf16.msra.mxu0 %v462
        %496 = vmatprep.subr.bf16.mxu0 0
        %497 = vmatpush1.bf16.msra.mxu0 %v463
        %498 = vmatprep.subr.bf16.mxu0 0
        %499 = vmatpush1.bf16.msra.mxu0 %v464
        %500 = vmatprep.subr.bf16.mxu0 0
        %501 = vmatpush1.bf16.msra.mxu0 %v465
        %502 = vmatprep.subr.bf16.mxu0 0
        %503 = vmatpush1.bf16.msra.mxu0 %v466
        %504 = vmatprep.subr.bf16.mxu0 0
        %505 = vmatpush1.bf16.msra.mxu0 %v467
        %506 = vmatprep.subr.bf16.mxu0 0
        %507 = vmatpush1.bf16.msra.mxu0 %v468
        %508 = vmatprep.subr.bf16.mxu0 0
        %509 = vmatpush1.bf16.msra.mxu0 %v469
        %510 = vmatprep.subr.bf16.mxu0 0
        %511 = vmatpush1.bf16.msra.mxu0 %v470
        %512 = vmatprep.subr.bf16.mxu0 0
        %513 = vmatpush1.bf16.msra.mxu0 %v471
        %514 = vmatprep.subr.bf16.mxu0 0
        %515 = vmatpush1.bf16.msra.mxu0 %v472
        %516 = vmatprep.subr.bf16.mxu0 0
        %517 = vmatpush1.bf16.msra.mxu0 %v473
        %518 = vmatprep.subr.bf16.mxu0 0
        %519 = vmatpush1.bf16.msra.mxu0 %v474
        %520 = vmatprep.subr.bf16.mxu0 0
        %521 = vmatpush1.bf16.msra.mxu0 %v475
        %522 = vmatprep.subr.bf16.mxu0 0
        %523 = vmatpush1.bf16.msra.mxu0 %v476
        %524 = vmatprep.subr.bf16.mxu0 0
        %525 = vmatpush1.bf16.msra.mxu0 %v477
        %526 = vmatprep.mubr.bf16.mxu0 %v367
        %527 = vmatmul.mubr.bf16.gmra.mrb[0].mxu0 %v366
        %v528 = vpop.f32.mrb[0].mxu0
        %v529 = vadd.f32 0.0, %v528
        %v530 = vpop.f32.mrb[0].mxu0
        %v531 = vpop.f32.mrb[0].mxu0
        %v532 = vadd.f32 0.0, %v531
        %v533 = vpop.f32.mrb[0].mxu0
        %534 = vmatprep.mubr.bf16.mxu0 %v369
        %535 = vmatmul.mubr.bf16.gmra.mrb[0].mxu0 %v368
        %v536 = vpop.f32.mrb[0].mxu0
        %v537 = vadd.f32 0.0, %v536
        %v538 = vpop.f32.mrb[0].mxu0
        %v539 = vpop.f32.mrb[0].mxu0
        %v540 = vadd.f32 0.0, %v539
        %v541 = vpop.f32.mrb[0].mxu0
        %542 = vmatprep.mubr.bf16.mxu0 %v371
        %543 = vmatmul.mubr.bf16.gmra.mrb[0].mxu0 %v370
        %v544 = vpop.f32.mrb[0].mxu0
        %v545 = vadd.f32 0.0, %v544
        %v546 = vpop.f32.mrb[0].mxu0
        %v547 = vpop.f32.mrb[0].mxu0
        %v548 = vadd.f32 0.0, %v547
        %v549 = vpop.f32.mrb[0].mxu0
        %550 = vmatprep.mubr.bf16.mxu0 %v373
        %551 = vmatmul.mubr.bf16.gmra.mrb[0].mxu0 %v372
        %v552 = vpop.f32.mrb[0].mxu0
        %v553 = vadd.f32 0.0, %v552
        %v554 = vpop.f32.mrb[0].mxu0
        %v555 = vpop.f32.mrb[0].mxu0
        %v556 = vadd.f32 0.0, %v555
        %v557 = vpop.f32.mrb[0].mxu0
        %558 = vmatprep.mubr.bf16.mxu0 %v375
        %559 = vmatmul.mubr.bf16.gmra.mrb[0].mxu0 %v374
        %v560 = vpop.f32.mrb[0].mxu0
        %v561 = vadd.f32 0.0, %v560
        %v562 = vpop.f32.mrb[0].mxu0
        %v563 = vpop.f32.mrb[0].mxu0
        %v564 = vadd.f32 0.0, %v563
        %v565 = vpop.f32.mrb[0].mxu0
        %566 = vmatprep.mubr.bf16.mxu0 %v377
        %567 = vmatmul.mubr.bf16.gmra.mrb[0].mxu0 %v376
        %v568 = vpop.f32.mrb[0].mxu0
        %v569 = vadd.f32 0.0, %v568
        %v570 = vpop.f32.mrb[0].mxu0
        %v571 = vpop.f32.mrb[0].mxu0
        %v572 = vadd.f32 0.0, %v571
        %v573 = vpop.f32.mrb[0].mxu0
        %574 = vmatprep.mubr.bf16.mxu0 %v379
        %575 = vmatmul.mubr.bf16.gmra.mrb[0].mxu0 %v378
        %v576 = vpop.f32.mrb[0].mxu0
        %v577 = vadd.f32 0.0, %v576
        %v578 = vpop.f32.mrb[0].mxu0
        %v579 = vpop.f32.mrb[0].mxu0
        %v580 = vadd.f32 0.0, %v579
        %v581 = vpop.f32.mrb[0].mxu0
        %582 = vmatprep.mubr.bf16.mxu0 %v381
        %583 = vmatmul.mubr.bf16.gmra.mrb[0].mxu0 %v380
        %v584 = vpop.f32.mrb[0].mxu0
        %v585 = vadd.f32 0.0, %v584
        %v586 = vpop.f32.mrb[0].mxu0
        %v587 = vpop.f32.mrb[0].mxu0
        %v588 = vadd.f32 0.0, %v587
        %v589 = vpop.f32.mrb[0].mxu0
        %590 = vdwg.mxu0
        %v591 = vadd.f32 %v254, %v529
        %v592 = vadd.f32 %v255, %v532
        %v593 = vadd.f32 %v256, %v537
        %v594 = vadd.f32 %v257, %v540
        %v595 = vadd.f32 %v258, %v545
        %v596 = vadd.f32 %v259, %v548
        %v597 = vadd.f32 %v260, %v553
        %v598 = vadd.f32 %v261, %v556
        %v599 = vadd.f32 %v262, %v561
        %v600 = vadd.f32 %v263, %v564
        %v601 = vadd.f32 %v264, %v569
        %v602 = vadd.f32 %v265, %v572
        %v603 = vadd.f32 %v266, %v577
        %v604 = vadd.f32 %v267, %v580
        %v605 = vadd.f32 %v268, %v585
        %v606 = vadd.f32 %v269, %v588
        %607 = vst [vmem:[#allocation2] sm:$0xff] %v591
        %608 = vst [vmem:[#allocation2 + $0x8] sm:$0xff] %v592
        %609 = vst [vmem:[#allocation2 + $0x10] sm:$0xff] %v593
        %610 = vst [vmem:[#allocation2 + $0x18] sm:$0xff] %v594
        %611 = vst [vmem:[#allocation2 + $0x20] sm:$0xff] %v595
        %612 = vst [vmem:[#allocation2 + $0x28] sm:$0xff] %v596
        %613 = vst [vmem:[#allocation2 + $0x30] sm:$0xff] %v597
        %614 = vst [vmem:[#allocation2 + $0x38] sm:$0xff] %v598
        %615 = vst [vmem:[#allocation2 + $0x40] sm:$0xff] %v599
        %616 = vst [vmem:[#allocation2 + $0x48] sm:$0xff] %v600
        %617 = vst [vmem:[#allocation2 + $0x50] sm:$0xff] %v601
        %618 = vst [vmem:[#allocation2 + $0x58] sm:$0xff] %v602
        %619 = vst [vmem:[#allocation2 + $0x60] sm:$0xff] %v603
        %620 = vst [vmem:[#allocation2 + $0x68] sm:$0xff] %v604
        %621 = vst [vmem:[#allocation2 + $0x70] sm:$0xff] %v605
        %622 = vst [vmem:[#allocation2 + $0x78] sm:$0xff] %v606
        // Predicated region
        $region45: #{tpu_custom_call.1} parent=31 // pred_check
          %p623 = pneg %p234
        $region46: #{tpu_custom_call.1} parent=31 // pred_check_branch
          %625 = sbr.rel (%p623) target = $region48
        $region47: #{tpu_custom_call.1} parent=31 // pred_region
          %v626 = vld [vmem:[#allocation2] sm:$0xff]
          %v627 = vld [vmem:[#allocation2 + $0x8] sm:$0xff]
          %v628 = vld [vmem:[#allocation2 + $0x10] sm:$0xff]
          %v629 = vld [vmem:[#allocation2 + $0x18] sm:$0xff]
          %v630 = vld [vmem:[#allocation2 + $0x20] sm:$0xff]
          %v631 = vld [vmem:[#allocation2 + $0x28] sm:$0xff]
          %v632 = vld [vmem:[#allocation2 + $0x30] sm:$0xff]
          %v633 = vld [vmem:[#allocation2 + $0x38] sm:$0xff]
          %v634 = vld [vmem:[#allocation2 + $0x40] sm:$0xff]
          %v635 = vld [vmem:[#allocation2 + $0x48] sm:$0xff]
          %v636 = vld [vmem:[#allocation2 + $0x50] sm:$0xff]
          %v637 = vld [vmem:[#allocation2 + $0x58] sm:$0xff]
          %v638 = vld [vmem:[#allocation2 + $0x60] sm:$0xff]
          %v639 = vld [vmem:[#allocation2 + $0x68] sm:$0xff]
          %v640 = vld [vmem:[#allocation2 + $0x70] sm:$0xff]
          %v641 = vld [vmem:[#allocation2 + $0x78] sm:$0xff]
          %v642 = vld [vmem:[%s2] sm:$0x1]
          %v644 = vlaneseq
          %v645 = vshrl.u32 %v644, 7
          %v646 = vsub.s32 0, %v645
          %v647 = vrot.slane %v642, %v646
          %v649 = vadd.f32 %v626, %v647
          %v650 = vadd.f32 %v627, %v647
          %v651 = vadd.f32 %v628, %v647
          %v652 = vadd.f32 %v629, %v647
          %v653 = vadd.f32 %v630, %v647
          %v654 = vadd.f32 %v631, %v647
          %v655 = vadd.f32 %v632, %v647
          %v656 = vadd.f32 %v633, %v647
          %v657 = vadd.f32 %v634, %v647
          %v658 = vadd.f32 %v635, %v647
          %v659 = vadd.f32 %v636, %v647
          %v660 = vadd.f32 %v637, %v647
          %v661 = vadd.f32 %v638, %v647
          %v662 = vadd.f32 %v639, %v647
          %v663 = vadd.f32 %v640, %v647
          %v664 = vadd.f32 %v641, %v647
          %v665 = vmax.f32 %v649, 0.0
          %v666 = vmax.f32 %v650, 0.0
          %v667 = vmax.f32 %v651, 0.0
          %v668 = vmax.f32 %v652, 0.0
          %v669 = vmax.f32 %v653, 0.0
          %v670 = vmax.f32 %v654, 0.0
          %v671 = vmax.f32 %v655, 0.0
          %v672 = vmax.f32 %v656, 0.0
          %v673 = vmax.f32 %v657, 0.0
          %v674 = vmax.f32 %v658, 0.0
          %v675 = vmax.f32 %v659, 0.0
          %v676 = vmax.f32 %v660, 0.0
          %v677 = vmax.f32 %v661, 0.0
          %v678 = vmax.f32 %v662, 0.0
          %v679 = vmax.f32 %v663, 0.0
          %v680 = vmax.f32 %v664, 0.0
          %v681 = vpack.c.bf16 %v666, %v665
          %v682 = vpack.c.bf16 %v668, %v667
          %v683 = vpack.c.bf16 %v670, %v669
          %v684 = vpack.c.bf16 %v672, %v671
          %v685 = vpack.c.bf16 %v674, %v673
          %v686 = vpack.c.bf16 %v676, %v675
          %v687 = vpack.c.bf16 %v678, %v677
          %v688 = vpack.c.bf16 %v680, %v679
          %v697 = vunpack.c.l.b16 %v681
          %v698 = vunpack.c.h.b16 %v681
          %v699 = vunpack.c.l.b16 %v682
          %v700 = vunpack.c.h.b16 %v682
          %v701 = vunpack.c.l.b16 %v683
          %v702 = vunpack.c.h.b16 %v683
          %v703 = vunpack.c.l.b16 %v684
          %v704 = vunpack.c.h.b16 %v684
          %v705 = vunpack.c.l.b16 %v685
          %v706 = vunpack.c.h.b16 %v685
          %v707 = vunpack.c.l.b16 %v686
          %v708 = vunpack.c.h.b16 %v686
          %v709 = vunpack.c.l.b16 %v687
          %v710 = vunpack.c.h.b16 %v687
          %v711 = vunpack.c.l.b16 %v688
          %v712 = vunpack.c.h.b16 %v688
          %v713 = vpack.c.b16 %v697, %v697
          %v714 = vpack.c.b16 %v698, %v698
          %v715 = vpack.c.b16 %v699, %v699
          %v716 = vpack.c.b16 %v700, %v700
          %v717 = vpack.c.b16 %v701, %v701
          %v718 = vpack.c.b16 %v702, %v702
          %v719 = vpack.c.b16 %v703, %v703
          %v720 = vpack.c.b16 %v704, %v704
          %v721 = vpack.c.b16 %v705, %v705
          %v722 = vpack.c.b16 %v706, %v706
          %v723 = vpack.c.b16 %v707, %v707
          %v724 = vpack.c.b16 %v708, %v708
          %v725 = vpack.c.b16 %v709, %v709
          %v726 = vpack.c.b16 %v710, %v710
          %v727 = vpack.c.b16 %v711, %v711
          %v728 = vpack.c.b16 %v712, %v712
          %745 = vst [vmem:[%s228] sm:$0xf] %v713
          %746 = vst [vmem:[%s228 + $0x4] sm:$0xf] %v714
          %747 = vst [vmem:[%s228 + $0x8] sm:$0xf] %v715
          %748 = vst [vmem:[%s228 + $0xc] sm:$0xf] %v716
          %749 = vst [vmem:[%s228 + $0x10] sm:$0xf] %v717
          %750 = vst [vmem:[%s228 + $0x14] sm:$0xf] %v718
          %751 = vst [vmem:[%s228 + $0x18] sm:$0xf] %v719
          %752 = vst [vmem:[%s228 + $0x1c] sm:$0xf] %v720
          %753 = vst [vmem:[%s228 + $0x20] sm:$0xf] %v721
          %754 = vst [vmem:[%s228 + $0x24] sm:$0xf] %v722
          %755 = vst [vmem:[%s228 + $0x28] sm:$0xf] %v723
          %756 = vst [vmem:[%s228 + $0x2c] sm:$0xf] %v724
          %757 = vst [vmem:[%s228 + $0x30] sm:$0xf] %v725
          %758 = vst [vmem:[%s228 + $0x34] sm:$0xf] %v726
          %759 = vst [vmem:[%s228 + $0x38] sm:$0xf] %v727
          %760 = vst [vmem:[%s228 + $0x3c] sm:$0xf] %v728
        $region48: #{tpu_custom_call.1} parent=31 // pred_fallthru
          _
        %s761 = sand.u32 %s116, 1
        %s762 = scalar_lea.sflag [#allocation5], %s761
        %s763 = sand.u32 %s116, 1
        %s764 = smul.addr %s763, 64
        %s765 = scalar_lea.vmem [#allocation8], %s764
        // Predicated region
        $region49: #{tpu_custom_call.1} parent=31 // pred_check
          %p766 = pneg %p126
        $region50: #{tpu_custom_call.1} parent=31 // pred_check_branch
          %768 = sbr.rel (%p766) target = $region52
        $region51: #{tpu_custom_call.1} parent=31 // pred_region
          %s769 = smul.u32 16, %s25
          %s771 = ssub.s32 1024, 1024
          %772 = vsyncadd %s762, %s771
          %s773 = smul.addr %s769, 64
          %s774 = scalar_lea.hbm %s3, %s773
          %s775 = sshll.u32 %s765, 4
          %s776 = int_to_ptr.vmem [resolvable:$true] %s775
          %781 = dma.vmem_to_hbm [thread:$0]  %s776, 1024, %s774, %s762, 64, 64, 4
        $region52: #{tpu_custom_call.1} parent=31 // pred_fallthru
          _
      $region32: #{tpu_custom_call.1} parent=5 // pred_fallthru
        _
      %p782 = scmp.le.s32.totalorder 2, %s16
      // Predicated region
      $region53: #{tpu_custom_call.1} parent=5 // pred_check
        %p783 = pneg %p782
      $region54: #{tpu_custom_call.1} parent=5 // pred_check_branch
        %785 = sbr.rel (%p783) target = $region56
      $region55: #{tpu_custom_call.1} parent=5 // pred_region
        %s786 = ssub.s32 %s16, 2
        // Predicated region
        $region57: #{tpu_custom_call.1} parent=55 // pred_check
          %p787 = pneg %p132
        $region58: #{tpu_custom_call.1} parent=55 // pred_check_branch
          %789 = sbr.rel (%p787) target = $region60
        $region59: #{tpu_custom_call.1} parent=55 // pred_region
          %s790 = sand.u32 %s117, 1
          %s791 = scalar_lea.sflag [#allocation5], %s790
          %s792 = sand.u32 %s117, 1
          %s793 = smul.addr %s792, 64
          %s794 = scalar_lea.vmem [#allocation8], %s793
          %795 = dma.done %s791, 1024
        $region60: #{tpu_custom_call.1} parent=55 // pred_fallthru
          _
      $region56: #{tpu_custom_call.1} parent=5 // pred_fallthru
        _
    $region6: #{tpu_custom_call.1} parent=1 // loop_footer
      %s20 = sadd.s32 1, %s16
    $region7: #{tpu_custom_call.1} parent=1 // loop_footer_branch
      %15 = sbr.rel target = $region3
    $region8: #{tpu_custom_call.1} parent=1 // loop_exit
      _
    %796 = vsyncpa [#allocation4], 1
    %s797 = scalar_lea.sflag [#allocation4], 1
    %798 = vsyncpa %s797, 1
    %799 = vsyncpa [#allocation7], 1
    %800 = vsyncpa [#allocation5], 1
    %s801 = scalar_lea.sflag [#allocation5], 1
    %802 = vsyncpa %s801, 1

</llo_original>
